<compile_context>
chip_gen: v7x
topology: tpu7x:2x2x1
jax: 0.10.0
libtpu: 0.0.40
codegen_flags: <defaults>
</compile_context>

<pallas_src>
import jax
import jax.numpy as jnp
from jax.experimental import pallas as pl
from jax.experimental.pallas import tpu as pltpu

BN_EPS = 1e-5  # nn.BatchNorm1d default
LANE = 128


def _round_up(x, m):
    return ((x + m - 1) // m) * m


# ---------------------------------------------------------------------------
# Kernel: one fused block-diagonal matmul + bias + relu + branch product + reduce
# ---------------------------------------------------------------------------
def _disc_kernel(u_ref, i_ref, w_ref, b_ref, o_ref):
    # eval-mode dropout == identity
    x = jnp.concatenate([u_ref[...], i_ref[...]], axis=-1)           # (TB, Du+Di)
    h = jnp.dot(x, w_ref[...], preferred_element_type=jnp.float32)   # (TB, 2*Hpad)
    h = jnp.maximum(h + b_ref[...], 0.0)
    hp = h.shape[-1] // 2                                             # 128-aligned split
    # out_dis = sum(user_rep * item_rep, dim=-1)
    o_ref[...] = jnp.sum(h[:, :hp] * h[:, hp:], axis=-1, keepdims=True)


# ---------------------------------------------------------------------------
# Host-side parameter preparation
# ---------------------------------------------------------------------------
def _fold_bn(p):
    """Fold eval-mode BatchNorm1d into the preceding Linear (f32)."""
    s1 = p["g1"] * jax.lax.rsqrt(p["v1"] + BN_EPS)           # (1, H)
    w1p = p["w1"] * s1                                        # (Du, H)
    b1p = (p["b1"] - p["m1"]) * s1 + p["be1"]                 # (1, H)
    s2 = p["g2"] * jax.lax.rsqrt(p["v2"] + BN_EPS)
    w2p = p["w2"] * s2
    b2p = (p["b2"] - p["m2"]) * s2 + p["be2"]
    return w1p, b1p, w2p, b2p


def _fuse_block_diag(w1p, b1p, w2p, b2p, compute_dtype):
    """Build block-diagonal W_cat (Du+Di, 2*Hpad) and b_cat (1, 2*Hpad) in f32,
    then cast the weight to the compute dtype. Padded columns are zero so
    relu(0) = 0 and they contribute nothing to the final dot product."""
    Du, H = w1p.shape
    Di = w2p.shape[0]
    Hpad = _round_up(H, LANE)
    wcat = jnp.zeros((Du + Di, 2 * Hpad), jnp.float32)
    wcat = wcat.at[:Du, :H].set(w1p).at[Du:, Hpad:Hpad + H].set(w2p)
    bcat = jnp.zeros((1, 2 * Hpad), jnp.float32)
    bcat = bcat.at[:, :H].set(b1p).at[:, Hpad:Hpad + H].set(b2p)
    return wcat.astype(compute_dtype), bcat, Hpad


def _vmem_budget_bytes():
    """Generation-aware VMEM cap (~3/4 of physical: v5e/v6e 128 MiB, v7x 64 MiB)."""
    try:
        info = pltpu.get_tpu_info()
        cap = getattr(info, "vmem_capacity_bytes", None)
        if cap:
            return int(cap) * 3 // 4
    except Exception:
        pass
    return 48 << 20  # conservative default (v7x-sized)


# ---------------------------------------------------------------------------
# Wrapper
# ---------------------------------------------------------------------------
def discriminator_forward(user_embedding, item_embedding, params,
                          compute_dtype=jnp.bfloat16):
    """Fused Pallas forward (eval mode). Returns shape (B,), matching torch."""
    B, Du = user_embedding.shape
    _, Di = item_embedding.shape

    w1p, b1p, w2p, b2p = _fold_bn(params)
    wcat, bcat, Hpad = _fuse_block_diag(w1p, b1p, w2p, b2p, compute_dtype)
    u = user_embedding.astype(compute_dtype)
    it = item_embedding.astype(compute_dtype)

    ebytes = jnp.dtype(compute_dtype).itemsize
    vmem_budget = _vmem_budget_bytes()

    # Per-batch-row VMEM: double-buffered streaming tiles + f32 temporaries.
    per_row = (2 * (_round_up(Du, LANE) + _round_up(Di, LANE)) * ebytes   # u/i tiles x2 bufs
               + 2 * LANE * 4                                             # (TB,1) out, lane-padded, x2 bufs
               + _round_up(Du + Di, LANE) * ebytes                        # concat temp
               + 2 * Hpad * 4)                                            # h temp (f32)
    resident = (_round_up(Du + Di, 8) * 2 * Hpad * ebytes                 # W_cat
                + 8 * 2 * Hpad * 4)                                       # b_cat (sublane-padded)

    # Batch tile: large (amortize ~0.35us/step pipeline overhead), 128-multiple,
    # shrunk until streaming tiles + weights fit in ~half the VMEM budget.
    TB = min(4096, max(LANE, _round_up(B, LANE)))
    while TB > LANE and 2 * resident + TB * per_row > vmem_budget // 2:
        TB = max(LANE, _round_up(TB // 2, LANE))
    # Keep >= 2 grid steps for mid-size batches so v7x's two TensorCores both get
    # work (harmless single extra step on v5e/v6e).
    if B > 2 * LANE:
        TB = min(TB, _round_up(pl.cdiv(B, 2), LANE))
    grid = (pl.cdiv(B, TB),)   # no host-side padding; Pallas handles the ragged tail

    vmem_need = 2 * resident + TB * per_row
    vmem_limit = int(min(max(2 * vmem_need, 16 << 20), vmem_budget))

    H = params["w1"].shape[1]
    cost = pl.CostEstimate(
        flops=2 * B * (Du + Di) * H + 4 * B * H,
        transcendentals=0,
        bytes_accessed=B * (Du + Di) * ebytes + B * 4
        + (Du + Di) * 2 * Hpad * ebytes + 2 * Hpad * 4,
    )

    row = lambda g: (g, 0)      # batch-tiled operands
    rep = lambda g: (0, 0)      # weights/bias: resident across grid steps

    def _resident_spec(shape, single_buffer):
        if single_buffer and hasattr(pl, "Buffered"):
            try:
                # index_map is (0,0) every step -> double buffering buys nothing.
                return pl.BlockSpec(shape, rep, pipeline_mode=pl.Buffered(1))
            except Exception:
                pass
        return pl.BlockSpec(shape, rep)

    def _build(single_buffer):
        in_specs = [
            pl.BlockSpec((TB, Du), row),
            pl.BlockSpec((TB, Di), row),
            _resident_spec((Du + Di, 2 * Hpad), single_buffer),
            _resident_spec((1, 2 * Hpad), single_buffer),
        ]
        out_specs = pl.BlockSpec((TB, 1), row)
        return pl.pallas_call(
            _disc_kernel,
            out_shape=jax.ShapeDtypeStruct((B, 1), jnp.float32),
            grid=grid,
            in_specs=in_specs,
            out_specs=out_specs,
            compiler_params=pltpu.CompilerParams(
                dimension_semantics=("parallel",),
                vmem_limit_bytes=vmem_limit,
            ),
            cost_estimate=cost,
        )

    try:
        out = _build(single_buffer=True)(u, it, wcat, bcat)
    except Exception:
        # Fallback for jax versions where Buffered(1) single-buffering is
        # unavailable/rejected - identical math with default double buffering.
        out = _build(single_buffer=False)(u, it, wcat, bcat)
    return out[:, 0]


# ---------------------------------------------------------------------------
# Parameters / references
# ---------------------------------------------------------------------------
def init_params(key, user_dim, item_dim, hidden_dim):
    ks = jax.random.split(key, 12)
    f32 = jnp.float32
    return {
        # Linear weights stored as (D_in, H) = torch weight.T
        "w1": 0.1 * jax.random.normal(ks[0], (user_dim, hidden_dim), f32),
        "b1": 0.05 * jax.random.normal(ks[1], (1, hidden_dim), f32),
        "w2": 0.1 * jax.random.normal(ks[2], (item_dim, hidden_dim), f32),
        "b2": 0.05 * jax.random.normal(ks[3], (1, hidden_dim), f32),
        # BatchNorm1d with non-trivial running stats so the folding is exercised.
        "g1": 1.0 + 0.1 * jax.random.normal(ks[4], (1, hidden_dim), f32),
        "be1": 0.05 * jax.random.normal(ks[5], (1, hidden_dim), f32),
        "m1": 0.1 * jax.random.normal(ks[6], (1, hidden_dim), f32),
        "v1": jax.random.uniform(ks[7], (1, hidden_dim), f32, 0.5, 1.5),
        "g2": 1.0 + 0.1 * jax.random.normal(ks[8], (1, hidden_dim), f32),
        "be2": 0.05 * jax.random.normal(ks[9], (1, hidden_dim), f32),
        "m2": 0.1 * jax.random.normal(ks[10], (1, hidden_dim), f32),
        "v2": jax.random.uniform(ks[11], (1, hidden_dim), f32, 0.5, 1.5),
    }


def reference_forward(u, it, p):
    """Full-f32, unfolded eval-mode BatchNorm reference (PyTorch semantics)."""
    hp = jax.lax.Precision.HIGHEST
    h1 = jnp.dot(u, p["w1"], precision=hp) + p["b1"]
    h1 = (h1 - p["m1"]) * jax.lax.rsqrt(p["v1"] + BN_EPS) * p["g1"] + p["be1"]
    h1 = jnp.maximum(h1, 0.0)
    h2 = jnp.dot(it, p["w2"], precision=hp) + p["b2"]
    h2 = (h2 - p["m2"]) * jax.lax.rsqrt(p["v2"] + BN_EPS) * p["g2"] + p["be2"]
    h2 = jnp.maximum(h2, 0.0)
    return jnp.sum(h1 * h2, axis=-1)


def reference_forward_quantized(u, it, p):
    """Same bf16 rounding as the kernel (folded BN), f32 math - strict check."""
    w1p, b1p, w2p, b2p = _fold_bn(p)
    q = lambda x: x.astype(jnp.bfloat16).astype(jnp.float32)
    h1 = jnp.maximum(jnp.dot(q(u), q(w1p)) + b1p, 0.0)
    h2 = jnp.maximum(jnp.dot(q(it), q(w2p)) + b2p, 0.0)
    return jnp.sum(h1 * h2, axis=-1)


if __name__ == "__main__":
    key = jax.random.PRNGKey(0)
    USER_DIM, ITEM_DIM, HIDDEN = 32, 16, 32
    kp, ku, ki = jax.random.split(key, 3)
    params = init_params(kp, USER_DIM, ITEM_DIM, HIDDEN)

    # Case 1: tiny batch (single ragged block).
    B = 8
    user_embedding = jax.random.normal(ku, (B, USER_DIM), jnp.float32)
    item_embedding = jax.random.normal(ki, (B, ITEM_DIM), jnp.float32)
    out = discriminator_forward(user_embedding, item_embedding, params)
    out = jax.block_until_ready(out)
    assert out.shape == (B,), out.shape
    ref_strict = reference_forward_quantized(user_embedding, item_embedding, params)
    ref_f32 = reference_forward(user_embedding, item_embedding, params)
    assert jnp.allclose(out, ref_strict, atol=1e-4, rtol=1e-3), (out, ref_strict)
    assert jnp.allclose(out, ref_f32, atol=1e-1, rtol=5e-2), (out, ref_f32)

    # Case 2: multi-step grid with a ragged last block (exercises no-pad path).
    B2 = 300
    ku2, ki2 = jax.random.split(jax.random.PRNGKey(1))
    u2 = jax.random.normal(ku2, (B2, USER_DIM), jnp.float32)
    i2 = jax.random.normal(ki2, (B2, ITEM_DIM), jnp.float32)
    out2 = jax.block_until_ready(discriminator_forward(u2, i2, params))
    assert out2.shape == (B2,), out2.shape
    ref2 = reference_forward_quantized(u2, i2, params)
    assert jnp.allclose(out2, ref2, atol=1e-4, rtol=1e-3), (out2, ref2)

    print("KERNEL_OK")
</pallas_src>

<mosaic_0001>
module attributes {stable_mosaic.version = 11 : i64} {
  func.func @_disc_kernel(%arg0: i32, %arg1: memref<128x32xbf16, #tpu.memory_space<vmem>>, %arg2: memref<128x16xbf16, #tpu.memory_space<vmem>>, %arg3: memref<48x256xbf16, #tpu.memory_space<vmem>>, %arg4: memref<1x256xf32, #tpu.memory_space<vmem>>, %arg5: memref<128x1xf32, #tpu.memory_space<vmem>>) attributes {dimension_semantics = [#tpu.dimension_semantics<parallel>], iteration_bounds = array<i64: 1>, scalar_prefetch = 0 : i64, scratch_operands = 0 : i64, tpu.core_type = #tpu.core_type<tc>, window_params = [{transform_indices = @transform_0, window_bounds = array<i64: 128, 32>}, {transform_indices = @transform_1, window_bounds = array<i64: 128, 16>}, {pipeline_mode = #tpu.pipeline_mode<synchronous>, transform_indices = @transform_2, window_bounds = array<i64: 48, 256>}, {pipeline_mode = #tpu.pipeline_mode<synchronous>, transform_indices = @transform_3, window_bounds = array<i64: 1, 256>}, {transform_indices = @transform_4, window_bounds = array<i64: 128, 1>}]} {
    %c0 = arith.constant 0 : index
    %c0_0 = arith.constant 0 : index
    %0 = vector.load %arg1[%c0, %c0_0] : memref<128x32xbf16, #tpu.memory_space<vmem>>, vector<128x32xbf16>
    %c0_1 = arith.constant 0 : index
    %c0_2 = arith.constant 0 : index
    %1 = vector.load %arg2[%c0_1, %c0_2] : memref<128x16xbf16, #tpu.memory_space<vmem>>, vector<128x16xbf16>
    %2 = tpu.concatenate %0, %1 in 1 : vector<128x32xbf16>, vector<128x16xbf16> -> vector<128x48xbf16>
    %c0_3 = arith.constant 0 : index
    %c0_4 = arith.constant 0 : index
    %3 = vector.load %arg3[%c0_3, %c0_4] : memref<48x256xbf16, #tpu.memory_space<vmem>>, vector<48x256xbf16>
    %cst = arith.constant dense<0.000000e+00> : vector<128x256xf32>
    %4 = tpu.matmul %2, %3, %cst {dimension_numbers = #tpu.dot_dimension_numbers<[1], [0], [0], [1], [0, 0, 1, 1], [], []>} : vector<128x48xbf16>, vector<48x256xbf16>, vector<128x256xf32> -> vector<128x256xf32>
    %c0_5 = arith.constant 0 : index
    %c0_6 = arith.constant 0 : index
    %5 = vector.load %arg4[%c0_5, %c0_6] : memref<1x256xf32, #tpu.memory_space<vmem>>, vector<1x256xf32>
    %6 = vector.broadcast %5 : vector<1x256xf32> to vector<128x256xf32>
    %7 = arith.addf %4, %6 : vector<128x256xf32>
    %cst_7 = arith.constant 0.000000e+00 : f32
    %8 = vector.broadcast %cst_7 : f32 to vector<128x256xf32>
    %9 = arith.maximumf %7, %8 : vector<128x256xf32>
    %10 = vector.extract_strided_slice %9 {offsets = [0, 0], sizes = [128, 128], strides = [1, 1]} : vector<128x256xf32> to vector<128x128xf32>
    %11 = vector.extract_strided_slice %9 {offsets = [0, 128], sizes = [128, 128], strides = [1, 1]} : vector<128x256xf32> to vector<128x128xf32>
    %12 = arith.mulf %10, %11 : vector<128x128xf32>
    %cst_8 = arith.constant dense<0.000000e+00> : vector<128xf32>
    %13 = vector.multi_reduction <add>, %12, %cst_8 [1] : vector<128x128xf32> to vector<128xf32>
    %14 = vector.shape_cast %13 : vector<128xf32> to vector<128x1xf32>
    %c0_9 = arith.constant 0 : index
    %c0_10 = arith.constant 0 : index
    %15 = vector.load %arg5[%c0_9, %c0_10] : memref<128x1xf32, #tpu.memory_space<vmem>>, vector<128x1xf32>
    tpu.vector_store %arg5[%c0_9, %c0_10], %14 {strides = array<i32>} : memref<128x1xf32, #tpu.memory_space<vmem>>, vector<128x1xf32>,
    return
  }
  func.func @transform_0(%arg0: i32) -> (i32, i32) {
    %c0_i32 = arith.constant 0 : i32
    %c0_i32_0 = arith.constant 0 : i32
    return %arg0, %c0_i32 : i32, i32
  }
  func.func @transform_1(%arg0: i32) -> (i32, i32) {
    %c0_i32 = arith.constant 0 : i32
    %c0_i32_0 = arith.constant 0 : i32
    return %arg0, %c0_i32 : i32, i32
  }
  func.func @transform_2(%arg0: i32) -> (i32, i32) {
    %c0_i32 = arith.constant 0 : i32
    %c0_i32_0 = arith.constant 0 : i32
    %c0_i32_1 = arith.constant 0 : i32
    return %c0_i32, %c0_i32_0 : i32, i32
  }
  func.func @transform_3(%arg0: i32) -> (i32, i32) {
    %c0_i32 = arith.constant 0 : i32
    %c0_i32_0 = arith.constant 0 : i32
    %c0_i32_1 = arith.constant 0 : i32
    return %c0_i32, %c0_i32_0 : i32, i32
  }
  func.func @transform_4(%arg0: i32) -> (i32, i32) {
    %c0_i32 = arith.constant 0 : i32
    %c0_i32_0 = arith.constant 0 : i32
    return %arg0, %c0_i32 : i32, i32
  }
}

module attributes {stable_mosaic.version = 11 : i64} {
  func.func @_disc_kernel(%arg0: i32, %arg1: memref<128x32xbf16, #tpu.memory_space<vmem>>, %arg2: memref<128x16xbf16, #tpu.memory_space<vmem>>, %arg3: memref<48x256xbf16, #tpu.memory_space<vmem>>, %arg4: memref<1x256xf32, #tpu.memory_space<vmem>>, %arg5: memref<128x1xf32, #tpu.memory_space<vmem>>) attributes {dimension_semantics = [#tpu.dimension_semantics<parallel>], iteration_bounds = array<i64: 1>, scalar_prefetch = 0 : i64, scratch_operands = 0 : i64, tpu.core_type = #tpu.core_type<tc>, window_params = [{transform_indices = @transform_0, window_bounds = array<i64: 128, 32>}, {transform_indices = @transform_1, window_bounds = array<i64: 128, 16>}, {pipeline_mode = #tpu.pipeline_mode<synchronous>, transform_indices = @transform_2, window_bounds = array<i64: 48, 256>}, {pipeline_mode = #tpu.pipeline_mode<synchronous>, transform_indices = @transform_3, window_bounds = array<i64: 1, 256>}, {transform_indices = @transform_4, window_bounds = array<i64: 128, 1>}]} {
    %c0 = arith.constant 0 : index
    %c0_0 = arith.constant 0 : index
    %0 = vector.load %arg1[%c0, %c0_0] : memref<128x32xbf16, #tpu.memory_space<vmem>>, vector<128x32xbf16>
    %c0_1 = arith.constant 0 : index
    %c0_2 = arith.constant 0 : index
    %1 = vector.load %arg2[%c0_1, %c0_2] : memref<128x16xbf16, #tpu.memory_space<vmem>>, vector<128x16xbf16>
    %2 = tpu.concatenate %0, %1 in 1 : vector<128x32xbf16>, vector<128x16xbf16> -> vector<128x48xbf16>
    %c0_3 = arith.constant 0 : index
    %c0_4 = arith.constant 0 : index
    %3 = vector.load %arg3[%c0_3, %c0_4] : memref<48x256xbf16, #tpu.memory_space<vmem>>, vector<48x256xbf16>
    %cst = arith.constant dense<0.000000e+00> : vector<128x256xf32>
    %4 = tpu.matmul %2, %3, %cst {dimension_numbers = #tpu.dot_dimension_numbers<[1], [0], [0], [1], [0, 0, 1, 1], [], []>} : vector<128x48xbf16>, vector<48x256xbf16>, vector<128x256xf32> -> vector<128x256xf32>
    %c0_5 = arith.constant 0 : index
    %c0_6 = arith.constant 0 : index
    %5 = vector.load %arg4[%c0_5, %c0_6] : memref<1x256xf32, #tpu.memory_space<vmem>>, vector<1x256xf32>
    %6 = vector.broadcast %5 : vector<1x256xf32> to vector<128x256xf32>
    %7 = arith.addf %4, %6 : vector<128x256xf32>
    %cst_7 = arith.constant 0.000000e+00 : f32
    %8 = vector.broadcast %cst_7 : f32 to vector<128x256xf32>
    %9 = arith.maximumf %7, %8 : vector<128x256xf32>
    %10 = vector.extract_strided_slice %9 {offsets = [0, 0], sizes = [128, 128], strides = [1, 1]} : vector<128x256xf32> to vector<128x128xf32>
    %11 = vector.extract_strided_slice %9 {offsets = [0, 128], sizes = [128, 128], strides = [1, 1]} : vector<128x256xf32> to vector<128x128xf32>
    %12 = arith.mulf %10, %11 : vector<128x128xf32>
    %cst_8 = arith.constant dense<0.000000e+00> : vector<128xf32>
    %13 = vector.multi_reduction <add>, %12, %cst_8 [1] : vector<128x128xf32> to vector<128xf32>
    %14 = vector.shape_cast %13 : vector<128xf32> to vector<128x1xf32>
    %c0_9 = arith.constant 0 : index
    %c0_10 = arith.constant 0 : index
    %15 = vector.load %arg5[%c0_9, %c0_10] : memref<128x1xf32, #tpu.memory_space<vmem>>, vector<128x1xf32>
    tpu.vector_store %arg5[%c0_9, %c0_10], %14 {strides = array<i32>} : memref<128x1xf32, #tpu.memory_space<vmem>>, vector<128x1xf32>,
    return
  }
  func.func @transform_0(%arg0: i32) -> (i32, i32) {
    %c0_i32 = arith.constant 0 : i32
    %c0_i32_0 = arith.constant 0 : i32
    return %arg0, %c0_i32 : i32, i32
  }
  func.func @transform_1(%arg0: i32) -> (i32, i32) {
    %c0_i32 = arith.constant 0 : i32
    %c0_i32_0 = arith.constant 0 : i32
    return %arg0, %c0_i32 : i32, i32
  }
  func.func @transform_2(%arg0: i32) -> (i32, i32) {
    %c0_i32 = arith.constant 0 : i32
    %c0_i32_0 = arith.constant 0 : i32
    %c0_i32_1 = arith.constant 0 : i32
    return %c0_i32, %c0_i32_0 : i32, i32
  }
  func.func @transform_3(%arg0: i32) -> (i32, i32) {
    %c0_i32 = arith.constant 0 : i32
    %c0_i32_0 = arith.constant 0 : i32
    %c0_i32_1 = arith.constant 0 : i32
    return %c0_i32, %c0_i32_0 : i32, i32
  }
  func.func @transform_4(%arg0: i32) -> (i32, i32) {
    %c0_i32 = arith.constant 0 : i32
    %c0_i32_0 = arith.constant 0 : i32
    return %arg0, %c0_i32 : i32, i32
  }
}

</mosaic_0001>

<llo_original>
// kernel: tpu_custom_call.1
$region0: #{tpu_custom_call.1}
  #allocation0 [shape = 'u32[]', space=smem, size = 0x4, offset = 0x4, fixed_abs, tag = 'smem constant byte address 0x4 - core index']
  #allocation1 [shape = 'u32[144,128]{1,0:T(1,128)}', space=vmem, size = 0x12000, scoped, tag = 'internal scratch']
  %s0 = inlined_call_operand.hbm [shape: bf16[8,32], index: 0, kind: input, shape index: {}]
  %s1 = inlined_call_operand.hbm [shape: bf16[8,16], index: 1, kind: input, shape index: {}]
  %s2 = inlined_call_operand.hbm [shape: bf16[48,256], index: 2, kind: input, shape index: {}]
  %s3 = inlined_call_operand.vmem [shape: f32[1,256], index: 3, kind: input, shape index: {}]
  %s4 = inlined_call_operand.vmem [shape: f32[8,1], index: 4, kind: output, shape index: {}]
  %s5 = sld [smem:[#allocation0]]
  $region72: #{tpu_custom_call.1} parent=0
    _
  %s7 = ssub.s32 1, %s5
  %s8 = scalar_select 0, %s7, %s5
  $region1: #{tpu_custom_call.1} parent=0
    #allocation2 [shape = 'u8[32768]{0}', space=vmem, size = 0x8000, scoped, tag = 'input window, operand 0, single buffered']
    #allocation3 [shape = 's32[1]{0}', space=sflag, size = 0x4, scoped, tag = 'scoped memory for tpu_custom_call.1']
    #allocation4 [shape = 'u8[32768]{0}', space=vmem, size = 0x8000, scoped, tag = 'input window, operand 1, single buffered']
    #allocation5 [shape = 's32[1]{0}', space=sflag, size = 0x4, scoped, tag = 'scoped memory for tpu_custom_call.1']
    #allocation6 [shape = 'u8[24576]{0}', space=vmem, size = 0x6000, scoped, tag = 'input window, operand 2, single buffered']
    #allocation7 [shape = 'u8[65536]{0}', space=vmem, size = 0x10000, scoped, tag = 'output window, operand 0, single buffered']
    %9 = vsyncpa [#allocation3], 0
    %10 = vsyncpa [#allocation5], 0
    // Predicated region
    $region2: #{tpu_custom_call.1} parent=1 // pred_check
      _
    $region3: #{tpu_custom_call.1} parent=1 // pred_check_branch
      %12 = sbr.rel (0) target = $region5
    $region4: #{tpu_custom_call.1} parent=1 // pred_region
      %s14 = ssub.s32 1024, 64
      %15 = vsyncadd [#allocation3], %s14
      %s16 = sshll.u32 [#allocation2], 4
      %s17 = int_to_ptr.vmem [resolvable:$true] %s16
      %22 = dma.hbm_to_vmem [thread:$0]  %s0, 64, %s17, [#allocation3], 64, 64, 4
    $region5: #{tpu_custom_call.1} parent=1 // pred_fallthru
      _
    // Predicated region
    $region6: #{tpu_custom_call.1} parent=1 // pred_check
      _
    $region7: #{tpu_custom_call.1} parent=1 // pred_check_branch
      %24 = sbr.rel (0) target = $region9
    $region8: #{tpu_custom_call.1} parent=1 // pred_region
      %s26 = ssub.s32 1024, 64
      %27 = vsyncadd [#allocation5], %s26
      %s28 = sshll.u32 [#allocation4], 4
      %s29 = int_to_ptr.vmem [resolvable:$true] %s28
      %34 = dma.hbm_to_vmem [thread:$0]  %s1, 64, %s29, [#allocation5], 64, 64, 4
    $region9: #{tpu_custom_call.1} parent=1 // pred_fallthru
      _
    // Predicated region
    $region10: #{tpu_custom_call.1} parent=1 // pred_check
      _
    $region11: #{tpu_custom_call.1} parent=1 // pred_check_branch
      %36 = sbr.rel (0) target = $region13
    $region12: #{tpu_custom_call.1} parent=1 // pred_region
      %s38 = ssub.s32 768, 768
      %39 = vsyncadd [#allocation5], %s38
      %s40 = sshll.u32 [#allocation6], 4
      %s41 = int_to_ptr.vmem [resolvable:$true] %s40
      %46 = dma.hbm_to_vmem [thread:$0]  %s2, 768, %s41, [#allocation5], 128, 128, 8
    $region13: #{tpu_custom_call.1} parent=1 // pred_fallthru
      _
    // Predicated region
    $region14: #{tpu_custom_call.1} parent=1 // pred_check
      _
    $region15: #{tpu_custom_call.1} parent=1 // pred_check_branch
      %48 = sbr.rel (0) target = $region17
    $region16: #{tpu_custom_call.1} parent=1 // pred_region
      _
    $region17: #{tpu_custom_call.1} parent=1 // pred_fallthru
      _
    // Predicated region
    $region18: #{tpu_custom_call.1} parent=1 // pred_check
      _
    $region19: #{tpu_custom_call.1} parent=1 // pred_check_branch
      %50 = sbr.rel (0) target = $region21
    $region20: #{tpu_custom_call.1} parent=1 // pred_region
      %51 = dma.done [#allocation3], 1024
    $region21: #{tpu_custom_call.1} parent=1 // pred_fallthru
      _
    // Predicated region
    $region22: #{tpu_custom_call.1} parent=1 // pred_check
      _
    $region23: #{tpu_custom_call.1} parent=1 // pred_check_branch
      %53 = sbr.rel (0) target = $region25
    $region24: #{tpu_custom_call.1} parent=1 // pred_region
      %54 = dma.done [#allocation5], 1024
    $region25: #{tpu_custom_call.1} parent=1 // pred_fallthru
      _
    // Predicated region
    $region26: #{tpu_custom_call.1} parent=1 // pred_check
      _
    $region27: #{tpu_custom_call.1} parent=1 // pred_check_branch
      %56 = sbr.rel (0) target = $region29
    $region28: #{tpu_custom_call.1} parent=1 // pred_region
      %57 = dma.done [#allocation5], 768
    $region29: #{tpu_custom_call.1} parent=1 // pred_fallthru
      _
    %v59 = vld [vmem:[#allocation2] sm:$0xf]
    %v60 = vld [vmem:[#allocation2 + $0x4] sm:$0xf]
    %v61 = vld [vmem:[#allocation2 + $0x8] sm:$0xf]
    %v62 = vld [vmem:[#allocation2 + $0xc] sm:$0xf]
    %v63 = vld [vmem:[#allocation2 + $0x10] sm:$0xf]
    %v64 = vld [vmem:[#allocation2 + $0x14] sm:$0xf]
    %v65 = vld [vmem:[#allocation2 + $0x18] sm:$0xf]
    %v66 = vld [vmem:[#allocation2 + $0x1c] sm:$0xf]
    %v67 = vld [vmem:[#allocation2 + $0x20] sm:$0xf]
    %v68 = vld [vmem:[#allocation2 + $0x24] sm:$0xf]
    %v69 = vld [vmem:[#allocation2 + $0x28] sm:$0xf]
    %v70 = vld [vmem:[#allocation2 + $0x2c] sm:$0xf]
    %v71 = vld [vmem:[#allocation2 + $0x30] sm:$0xf]
    %v72 = vld [vmem:[#allocation2 + $0x34] sm:$0xf]
    %v73 = vld [vmem:[#allocation2 + $0x38] sm:$0xf]
    %v74 = vld [vmem:[#allocation2 + $0x3c] sm:$0xf]
    %v75 = vld [vmem:[#allocation4] sm:$0xf]
    %v76 = vld [vmem:[#allocation4 + $0x4] sm:$0xf]
    %v77 = vld [vmem:[#allocation4 + $0x8] sm:$0xf]
    %v78 = vld [vmem:[#allocation4 + $0xc] sm:$0xf]
    %v79 = vld [vmem:[#allocation4 + $0x10] sm:$0xf]
    %v80 = vld [vmem:[#allocation4 + $0x14] sm:$0xf]
    %v81 = vld [vmem:[#allocation4 + $0x18] sm:$0xf]
    %v82 = vld [vmem:[#allocation4 + $0x1c] sm:$0xf]
    %v83 = vld [vmem:[#allocation4 + $0x20] sm:$0xf]
    %v84 = vld [vmem:[#allocation4 + $0x24] sm:$0xf]
    %v85 = vld [vmem:[#allocation4 + $0x28] sm:$0xf]
    %v86 = vld [vmem:[#allocation4 + $0x2c] sm:$0xf]
    %v87 = vld [vmem:[#allocation4 + $0x30] sm:$0xf]
    %v88 = vld [vmem:[#allocation4 + $0x34] sm:$0xf]
    %v89 = vld [vmem:[#allocation4 + $0x38] sm:$0xf]
    %v90 = vld [vmem:[#allocation4 + $0x3c] sm:$0xf]
    %v107 = vunpack.c.l.b16 %v59
    %v108 = vunpack.c.l.b16 %v60
    %v109 = vunpack.c.l.b16 %v61
    %v110 = vunpack.c.l.b16 %v62
    %v111 = vunpack.c.l.b16 %v63
    %v112 = vunpack.c.l.b16 %v64
    %v113 = vunpack.c.l.b16 %v65
    %v114 = vunpack.c.l.b16 %v66
    %v115 = vunpack.c.l.b16 %v67
    %v116 = vunpack.c.l.b16 %v68
    %v117 = vunpack.c.l.b16 %v69
    %v118 = vunpack.c.l.b16 %v70
    %v119 = vunpack.c.l.b16 %v71
    %v120 = vunpack.c.l.b16 %v72
    %v121 = vunpack.c.l.b16 %v73
    %v122 = vunpack.c.l.b16 %v74
    %v123 = vpack.c.b16 %v108, %v107
    %v124 = vpack.c.b16 %v110, %v109
    %v125 = vpack.c.b16 %v112, %v111
    %v126 = vpack.c.b16 %v114, %v113
    %v127 = vpack.c.b16 %v116, %v115
    %v128 = vpack.c.b16 %v118, %v117
    %v129 = vpack.c.b16 %v120, %v119
    %v130 = vpack.c.b16 %v122, %v121
    %v147 = vunpack.c.l.b16 %v75
    %v148 = vunpack.c.l.b16 %v76
    %v149 = vunpack.c.l.b16 %v77
    %v150 = vunpack.c.l.b16 %v78
    %v151 = vunpack.c.l.b16 %v79
    %v152 = vunpack.c.l.b16 %v80
    %v153 = vunpack.c.l.b16 %v81
    %v154 = vunpack.c.l.b16 %v82
    %v155 = vunpack.c.l.b16 %v83
    %v156 = vunpack.c.l.b16 %v84
    %v157 = vunpack.c.l.b16 %v85
    %v158 = vunpack.c.l.b16 %v86
    %v159 = vunpack.c.l.b16 %v87
    %v160 = vunpack.c.l.b16 %v88
    %v161 = vunpack.c.l.b16 %v89
    %v162 = vunpack.c.l.b16 %v90
    %v163 = vpack.c.b16 %v148, %v147
    %v164 = vpack.c.b16 %v150, %v149
    %v165 = vpack.c.b16 %v152, %v151
    %v166 = vpack.c.b16 %v154, %v153
    %v167 = vpack.c.b16 %v156, %v155
    %v168 = vpack.c.b16 %v158, %v157
    %v169 = vpack.c.b16 %v160, %v159
    %v170 = vpack.c.b16 %v162, %v161
    %171 = vrot.lane.b32.xlu0 %v163, 32
    %v172 = vpop.permute.xlu0 %171
    %173 = vrot.lane.b32.xlu0 %v164, 32
    %v174 = vpop.permute.xlu0 %173
    %175 = vrot.lane.b32.xlu0 %v165, 32
    %v176 = vpop.permute.xlu0 %175
    %177 = vrot.lane.b32.xlu0 %v166, 32
    %v178 = vpop.permute.xlu0 %177
    %179 = vrot.lane.b32.xlu0 %v167, 32
    %v180 = vpop.permute.xlu0 %179
    %181 = vrot.lane.b32.xlu0 %v168, 32
    %v182 = vpop.permute.xlu0 %181
    %183 = vrot.lane.b32.xlu0 %v169, 32
    %v184 = vpop.permute.xlu0 %183
    %185 = vrot.lane.b32.xlu0 %v170, 32
    %v186 = vpop.permute.xlu0 %185
    %vm187 = vcmask 261120
    %v190 = vsel %vm187, %v123, %v172
    %v193 = vsel %vm187, %v124, %v174
    %v196 = vsel %vm187, %v125, %v176
    %v199 = vsel %vm187, %v126, %v178
    %v202 = vsel %vm187, %v127, %v180
    %v205 = vsel %vm187, %v128, %v182
    %v208 = vsel %vm187, %v129, %v184
    %v211 = vsel %vm187, %v130, %v186
    %v212 = vld [vmem:[#allocation6] sm:$0xff]
    %v213 = vld [vmem:[#allocation6 + $0x8] sm:$0xff]
    %v214 = vld [vmem:[#allocation6 + $0x10] sm:$0xff]
    %v215 = vld [vmem:[#allocation6 + $0x18] sm:$0xff]
    %v216 = vld [vmem:[#allocation6 + $0x20] sm:$0xff]
    %v217 = vld [vmem:[#allocation6 + $0x28] sm:$0xff]
    %v218 = vld [vmem:[%s3] sm:$0x3]
    %v220 = vlaneseq
    %v221 = vshrl.u32 %v220, 7
    %v222 = vsub.s32 0, %v221
    %v223 = vrot.slane %v218, %v222
    %v224 = vlaneseq
    %v225 = vshrl.u32 %v224, 7
    %v226 = vsub.s32 1, %v225
    %v227 = vrot.slane %v218, %v226
    %v236 = vunpack.c.l.b16 %v212
    %v237 = vunpack.c.h.b16 %v212
    %v238 = vunpack.c.l.b16 %v213
    %v239 = vunpack.c.h.b16 %v213
    %v240 = vunpack.c.l.b16 %v214
    %v241 = vunpack.c.h.b16 %v214
    %v242 = vunpack.c.l.b16 %v215
    %v243 = vunpack.c.h.b16 %v215
    %v244 = vunpack.c.l.b16 %v216
    %v245 = vunpack.c.h.b16 %v216
    %v246 = vunpack.c.l.b16 %v217
    %v247 = vunpack.c.h.b16 %v217
    %v248 = vpack.c.b16 %v238, %v236
    %v249 = vpack.c.b16 %v239, %v237
    %v250 = vpack.c.b16 %v242, %v240
    %v251 = vpack.c.b16 %v243, %v241
    %v252 = vpack.c.b16 %v246, %v244
    %v253 = vpack.c.b16 %v247, %v245
    %vm260 = vcmask 392192
    %v261 = vsel %vm260, %v190, 0
    %v263 = vsel %vm260, %v193, 0
    %v265 = vsel %vm260, %v196, 0
    %v267 = vsel %vm260, %v199, 0
    %v269 = vsel %vm260, %v202, 0
    %v271 = vsel %vm260, %v205, 0
    %v273 = vsel %vm260, %v208, 0
    %v275 = vsel %vm260, %v211, 0
    %277 = vmatprep.subr.bf16.mxu0 %v249
    %278 = vmatpush1.bf16.msra.mxu0 %v248
    %279 = vmatprep.subr.bf16.mxu0 %v251
    %280 = vmatpush1.bf16.msra.mxu0 %v250
    %281 = vmatprep.subr.bf16.mxu0 %v253
    %282 = vmatpush1.bf16.msra.mxu0 %v252
    %283 = vmatprep.subr.bf16.mxu0 0
    %284 = vmatpush1.bf16.msra.mxu0 0
    %285 = vmatprep.subr.bf16.mxu0 0
    %286 = vmatpush1.bf16.msra.mxu0 0
    %287 = vmatprep.subr.bf16.mxu0 0
    %288 = vmatpush1.bf16.msra.mxu0 0
    %289 = vmatprep.subr.bf16.mxu0 0
    %290 = vmatpush1.bf16.msra.mxu0 0
    %291 = vmatprep.subr.bf16.mxu0 0
    %292 = vmatpush1.bf16.msra.mxu0 0
    %293 = vmatprep.subr.bf16.mxu0 0
    %294 = vmatpush1.bf16.msra.mxu0 0
    %295 = vmatprep.subr.bf16.mxu0 0
    %296 = vmatpush1.bf16.msra.mxu0 0
    %297 = vmatprep.subr.bf16.mxu0 0
    %298 = vmatpush1.bf16.msra.mxu0 0
    %299 = vmatprep.subr.bf16.mxu0 0
    %300 = vmatpush1.bf16.msra.mxu0 0
    %301 = vmatprep.subr.bf16.mxu0 0
    %302 = vmatpush1.bf16.msra.mxu0 0
    %303 = vmatprep.subr.bf16.mxu0 0
    %304 = vmatpush1.bf16.msra.mxu0 0
    %305 = vmatprep.subr.bf16.mxu0 0
    %306 = vmatpush1.bf16.msra.mxu0 0
    %307 = vmatprep.subr.bf16.mxu0 0
    %308 = vmatpush1.bf16.msra.mxu0 0
    %309 = vmatprep.mubr.bf16.mxu0 0
    %310 = vmatmul.mubr.bf16.gmra.mrb[0].mxu0 %v261
    %v311 = vpop.f32.mrb[0].mxu0
    %v312 = vadd.f32 %v223, %v311
    %v313 = vpop.f32.mrb[0].mxu0
    %v314 = vadd.f32 %v227, %v313
    %v315 = vpop.f32.mrb[0].mxu0
    %v316 = vadd.f32 %v223, %v315
    %v317 = vpop.f32.mrb[0].mxu0
    %v318 = vadd.f32 %v227, %v317
    %319 = vmatprep.mubr.bf16.mxu0 0
    %320 = vmatmul.mubr.bf16.gmra.mrb[0].mxu0 %v263
    %v321 = vpop.f32.mrb[0].mxu0
    %v322 = vadd.f32 %v223, %v321
    %v323 = vpop.f32.mrb[0].mxu0
    %v324 = vadd.f32 %v227, %v323
    %v325 = vpop.f32.mrb[0].mxu0
    %v326 = vadd.f32 %v223, %v325
    %v327 = vpop.f32.mrb[0].mxu0
    %v328 = vadd.f32 %v227, %v327
    %329 = vmatprep.mubr.bf16.mxu0 0
    %330 = vmatmul.mubr.bf16.gmra.mrb[0].mxu0 %v265
    %v331 = vpop.f32.mrb[0].mxu0
    %v332 = vadd.f32 %v223, %v331
    %v333 = vpop.f32.mrb[0].mxu0
    %v334 = vadd.f32 %v227, %v333
    %v335 = vpop.f32.mrb[0].mxu0
    %v336 = vadd.f32 %v223, %v335
    %v337 = vpop.f32.mrb[0].mxu0
    %v338 = vadd.f32 %v227, %v337
    %339 = vmatprep.mubr.bf16.mxu0 0
    %340 = vmatmul.mubr.bf16.gmra.mrb[0].mxu0 %v267
    %v341 = vpop.f32.mrb[0].mxu0
    %v342 = vadd.f32 %v223, %v341
    %v343 = vpop.f32.mrb[0].mxu0
    %v344 = vadd.f32 %v227, %v343
    %v345 = vpop.f32.mrb[0].mxu0
    %v346 = vadd.f32 %v223, %v345
    %v347 = vpop.f32.mrb[0].mxu0
    %v348 = vadd.f32 %v227, %v347
    %349 = vmatprep.mubr.bf16.mxu0 0
    %350 = vmatmul.mubr.bf16.gmra.mrb[0].mxu0 %v269
    %v351 = vpop.f32.mrb[0].mxu0
    %v352 = vadd.f32 %v223, %v351
    %v353 = vpop.f32.mrb[0].mxu0
    %v354 = vadd.f32 %v227, %v353
    %v355 = vpop.f32.mrb[0].mxu0
    %v356 = vadd.f32 %v223, %v355
    %v357 = vpop.f32.mrb[0].mxu0
    %v358 = vadd.f32 %v227, %v357
    %359 = vmatprep.mubr.bf16.mxu0 0
    %360 = vmatmul.mubr.bf16.gmra.mrb[0].mxu0 %v271
    %v361 = vpop.f32.mrb[0].mxu0
    %v362 = vadd.f32 %v223, %v361
    %v363 = vpop.f32.mrb[0].mxu0
    %v364 = vadd.f32 %v227, %v363
    %v365 = vpop.f32.mrb[0].mxu0
    %v366 = vadd.f32 %v223, %v365
    %v367 = vpop.f32.mrb[0].mxu0
    %v368 = vadd.f32 %v227, %v367
    %369 = vmatprep.mubr.bf16.mxu0 0
    %370 = vmatmul.mubr.bf16.gmra.mrb[0].mxu0 %v273
    %v371 = vpop.f32.mrb[0].mxu0
    %v372 = vadd.f32 %v223, %v371
    %v373 = vpop.f32.mrb[0].mxu0
    %v374 = vadd.f32 %v227, %v373
    %v375 = vpop.f32.mrb[0].mxu0
    %v376 = vadd.f32 %v223, %v375
    %v377 = vpop.f32.mrb[0].mxu0
    %v378 = vadd.f32 %v227, %v377
    %379 = vmatprep.mubr.bf16.mxu0 0
    %380 = vmatmul.mubr.bf16.gmra.mrb[0].mxu0 %v275
    %v381 = vpop.f32.mrb[0].mxu0
    %v382 = vadd.f32 %v223, %v381
    %v383 = vpop.f32.mrb[0].mxu0
    %v384 = vadd.f32 %v227, %v383
    %v385 = vpop.f32.mrb[0].mxu0
    %v386 = vadd.f32 %v223, %v385
    %v387 = vpop.f32.mrb[0].mxu0
    %v388 = vadd.f32 %v227, %v387
    %389 = vdwg.mxu0
    %v390 = vmax.f32 %v312, 0.0
    %v391 = vmax.f32 %v314, 0.0
    %v392 = vmax.f32 %v316, 0.0
    %v393 = vmax.f32 %v318, 0.0
    %v394 = vmax.f32 %v322, 0.0
    %v395 = vmax.f32 %v324, 0.0
    %v396 = vmax.f32 %v326, 0.0
    %v397 = vmax.f32 %v328, 0.0
    %v398 = vmax.f32 %v332, 0.0
    %v399 = vmax.f32 %v334, 0.0
    %v400 = vmax.f32 %v336, 0.0
    %v401 = vmax.f32 %v338, 0.0
    %v402 = vmax.f32 %v342, 0.0
    %v403 = vmax.f32 %v344, 0.0
    %v404 = vmax.f32 %v346, 0.0
    %v405 = vmax.f32 %v348, 0.0
    %v406 = vmax.f32 %v352, 0.0
    %v407 = vmax.f32 %v354, 0.0
    %v408 = vmax.f32 %v356, 0.0
    %v409 = vmax.f32 %v358, 0.0
    %v410 = vmax.f32 %v362, 0.0
    %v411 = vmax.f32 %v364, 0.0
    %v412 = vmax.f32 %v366, 0.0
    %v413 = vmax.f32 %v368, 0.0
    %v414 = vmax.f32 %v372, 0.0
    %v415 = vmax.f32 %v374, 0.0
    %v416 = vmax.f32 %v376, 0.0
    %v417 = vmax.f32 %v378, 0.0
    %v418 = vmax.f32 %v382, 0.0
    %v419 = vmax.f32 %v384, 0.0
    %v420 = vmax.f32 %v386, 0.0
    %v421 = vmax.f32 %v388, 0.0
    %v422 = vmul.f32 %v390, %v391
    %v423 = vmul.f32 %v392, %v393
    %v424 = vmul.f32 %v394, %v395
    %v425 = vmul.f32 %v396, %v397
    %v426 = vmul.f32 %v398, %v399
    %v427 = vmul.f32 %v400, %v401
    %v428 = vmul.f32 %v402, %v403
    %v429 = vmul.f32 %v404, %v405
    %v430 = vmul.f32 %v406, %v407
    %v431 = vmul.f32 %v408, %v409
    %v432 = vmul.f32 %v410, %v411
    %v433 = vmul.f32 %v412, %v413
    %v434 = vmul.f32 %v414, %v415
    %v435 = vmul.f32 %v416, %v417
    %v436 = vmul.f32 %v418, %v419
    %v437 = vmul.f32 %v420, %v421
    %438 = vadd.xlane.f32.xlu0 %v422
    %v439 = vpop.xlane.xlu0 %438
    %440 = vadd.xlane.f32.xlu0 %v423
    %v441 = vpop.xlane.xlu0 %440
    %442 = vadd.xlane.f32.xlu0 %v424
    %v443 = vpop.xlane.xlu0 %442
    %444 = vadd.xlane.f32.xlu0 %v425
    %v445 = vpop.xlane.xlu0 %444
    %446 = vadd.xlane.f32.xlu0 %v426
    %v447 = vpop.xlane.xlu0 %446
    %448 = vadd.xlane.f32.xlu0 %v427
    %v449 = vpop.xlane.xlu0 %448
    %450 = vadd.xlane.f32.xlu0 %v428
    %v451 = vpop.xlane.xlu0 %450
    %452 = vadd.xlane.f32.xlu0 %v429
    %v453 = vpop.xlane.xlu0 %452
    %454 = vadd.xlane.f32.xlu0 %v430
    %v455 = vpop.xlane.xlu0 %454
    %456 = vadd.xlane.f32.xlu0 %v431
    %v457 = vpop.xlane.xlu0 %456
    %458 = vadd.xlane.f32.xlu0 %v432
    %v459 = vpop.xlane.xlu0 %458
    %460 = vadd.xlane.f32.xlu0 %v433
    %v461 = vpop.xlane.xlu0 %460
    %462 = vadd.xlane.f32.xlu0 %v434
    %v463 = vpop.xlane.xlu0 %462
    %464 = vadd.xlane.f32.xlu0 %v435
    %v465 = vpop.xlane.xlu0 %464
    %466 = vadd.xlane.f32.xlu0 %v436
    %v467 = vpop.xlane.xlu0 %466
    %468 = vadd.xlane.f32.xlu0 %v437
    %v469 = vpop.xlane.xlu0 %468
    %vm470 = vcmask 7168
    %471 = vst.msk [vmem:[#allocation7] sm:$0xff] %vm470, %v439
    %472 = vst.msk [vmem:[#allocation7 + $0x8] sm:$0xff] %vm470, %v441
    %473 = vst.msk [vmem:[#allocation7 + $0x10] sm:$0xff] %vm470, %v443
    %474 = vst.msk [vmem:[#allocation7 + $0x18] sm:$0xff] %vm470, %v445
    %475 = vst.msk [vmem:[#allocation7 + $0x20] sm:$0xff] %vm470, %v447
    %476 = vst.msk [vmem:[#allocation7 + $0x28] sm:$0xff] %vm470, %v449
    %477 = vst.msk [vmem:[#allocation7 + $0x30] sm:$0xff] %vm470, %v451
    %478 = vst.msk [vmem:[#allocation7 + $0x38] sm:$0xff] %vm470, %v453
    %479 = vst.msk [vmem:[#allocation7 + $0x40] sm:$0xff] %vm470, %v455
    %480 = vst.msk [vmem:[#allocation7 + $0x48] sm:$0xff] %vm470, %v457
    %481 = vst.msk [vmem:[#allocation7 + $0x50] sm:$0xff] %vm470, %v459
    %482 = vst.msk [vmem:[#allocation7 + $0x58] sm:$0xff] %vm470, %v461
    %483 = vst.msk [vmem:[#allocation7 + $0x60] sm:$0xff] %vm470, %v463
    %484 = vst.msk [vmem:[#allocation7 + $0x68] sm:$0xff] %vm470, %v465
    %485 = vst.msk [vmem:[#allocation7 + $0x70] sm:$0xff] %vm470, %v467
    %486 = vst.msk [vmem:[#allocation7 + $0x78] sm:$0xff] %vm470, %v469
    // Predicated region
    $region30: #{tpu_custom_call.1} parent=1 // pred_check
      _
    $region31: #{tpu_custom_call.1} parent=1 // pred_check_branch
      %488 = sbr.rel (0) target = $region33
    $region32: #{tpu_custom_call.1} parent=1 // pred_region
      // Predicated region
      $region34: #{tpu_custom_call.1} parent=32 // pred_check
        _
      $region35: #{tpu_custom_call.1} parent=32 // pred_check_branch
        %490 = sbr.rel (0) target = $region37
      $region36: #{tpu_custom_call.1} parent=32 // pred_region
        // Predicated region
        $region38: #{tpu_custom_call.1} parent=36 // pred_check
          _
        $region39: #{tpu_custom_call.1} parent=36 // pred_check_branch
          %492 = sbr.rel (0) target = $region41
        $region40: #{tpu_custom_call.1} parent=36 // pred_region
          // Predicated region
          $region53: #{tpu_custom_call.1} parent=40 // pred_check
            _
          $region54: #{tpu_custom_call.1} parent=40 // pred_check_branch
            %507 = sbr.rel (0) target = $region56
          $region55: #{tpu_custom_call.1} parent=40 // pred_region
            loop: start=0, step=1, limit=1
            $region57: #{tpu_custom_call.1} parent=55 // loop_pre_header
              _
            $region58: #{tpu_custom_call.1} parent=55 // loop_header
              %s509 = sphi 0, %s513
              %p510 = scmp.ge.s32.totalorder %s509, 1
              %s514 = sphi [#allocation7], [#allocation7]
              %s515 = sphi %s4, %s4
            $region59: #{tpu_custom_call.1} parent=55 // loop_header_branch
              %512 = sbr.rel (%p510) target = $region63
            $region60: #{tpu_custom_call.1} parent=55 // loop_body
              %v516 = vld [vmem:[%s514] sm:$0xff]
              %517 = vst [vmem:[%s515] sm:$0xff] %v516
            $region61: #{tpu_custom_call.1} parent=55 // loop_footer
              %s513 = sadd.s32 1, %s509
            $region62: #{tpu_custom_call.1} parent=55 // loop_footer_branch
              %508 = sbr.rel target = $region58
            $region63: #{tpu_custom_call.1} parent=55 // loop_exit
              _
          $region56: #{tpu_custom_call.1} parent=40 // pred_fallthru
            _
          // Predicated region
          $region64: #{tpu_custom_call.1} parent=40 // pred_check
            _
          $region65: #{tpu_custom_call.1} parent=40 // pred_check_branch
            %519 = sbr.rel target = $region67
          $region66: #{tpu_custom_call.1} parent=40 // pred_region
            _
          $region67: #{tpu_custom_call.1} parent=40 // pred_fallthru
            _
        $region41: #{tpu_custom_call.1} parent=36 // pred_fallthru
          _
        // Predicated region
        $region42: #{tpu_custom_call.1} parent=36 // pred_check
          _
        $region43: #{tpu_custom_call.1} parent=36 // pred_check_branch
          %494 = sbr.rel target = $region45
        $region44: #{tpu_custom_call.1} parent=36 // pred_region
          loop: start=0, step=1, limit=1
          $region46: #{tpu_custom_call.1} parent=44 // loop_pre_header
            _
          $region47: #{tpu_custom_call.1} parent=44 // loop_header
            %s497 = sphi 0, %s501
            %p498 = scmp.ge.s32.totalorder %s497, 1
            %s502 = sphi [#allocation7], [#allocation7]
            %s503 = sphi %s4, %s4
          $region48: #{tpu_custom_call.1} parent=44 // loop_header_branch
            %500 = sbr.rel (%p498) target = $region52
          $region49: #{tpu_custom_call.1} parent=44 // loop_body
            %v504 = vld [vmem:[%s502] sm:$0xff]
            %505 = vst [vmem:[%s503] sm:$0xff] %v504
          $region50: #{tpu_custom_call.1} parent=44 // loop_footer
            %s501 = sadd.s32 1, %s497
          $region51: #{tpu_custom_call.1} parent=44 // loop_footer_branch
            %496 = sbr.rel target = $region47
          $region52: #{tpu_custom_call.1} parent=44 // loop_exit
            _
        $region45: #{tpu_custom_call.1} parent=36 // pred_fallthru
          _
      $region37: #{tpu_custom_call.1} parent=32 // pred_fallthru
        _
      %520 = vnop
    $region33: #{tpu_custom_call.1} parent=1 // pred_fallthru
      _
    // Predicated region
    $region68: #{tpu_custom_call.1} parent=1 // pred_check
      _
    $region69: #{tpu_custom_call.1} parent=1 // pred_check_branch
      %522 = sbr.rel (0) target = $region71
    $region70: #{tpu_custom_call.1} parent=1 // pred_region
      _
    $region71: #{tpu_custom_call.1} parent=1 // pred_fallthru
      _
    %523 = vsyncpa [#allocation3], 1
    %524 = vsyncpa [#allocation5], 1

// kernel: tpu_custom_call.1
$region0: #{tpu_custom_call.1}
  #allocation0 [shape = 'u32[]', space=smem, size = 0x4, offset = 0x4, fixed_abs, tag = 'smem constant byte address 0x4 - core index']
  #allocation1 [shape = 'u32[144,128]{1,0:T(1,128)}', space=vmem, size = 0x12000, scoped, tag = 'internal scratch']
  %s0 = inlined_call_operand.hbm [shape: bf16[8,32], index: 0, kind: input, shape index: {}]
  %s1 = inlined_call_operand.hbm [shape: bf16[8,16], index: 1, kind: input, shape index: {}]
  %s2 = inlined_call_operand.hbm [shape: bf16[48,256], index: 2, kind: input, shape index: {}]
  %s3 = inlined_call_operand.vmem [shape: f32[1,256], index: 3, kind: input, shape index: {}]
  %s4 = inlined_call_operand.vmem [shape: f32[8,1], index: 4, kind: output, shape index: {}]
  %s5 = sld [smem:[#allocation0]]
  $region72: #{tpu_custom_call.1} parent=0
    _
  %s7 = ssub.s32 1, %s5
  %s8 = scalar_select 0, %s7, %s5
  $region1: #{tpu_custom_call.1} parent=0
    #allocation2 [shape = 'u8[32768]{0}', space=vmem, size = 0x8000, scoped, tag = 'input window, operand 0, single buffered']
    #allocation3 [shape = 's32[1]{0}', space=sflag, size = 0x4, scoped, tag = 'scoped memory for tpu_custom_call.1']
    #allocation4 [shape = 'u8[32768]{0}', space=vmem, size = 0x8000, scoped, tag = 'input window, operand 1, single buffered']
    #allocation5 [shape = 's32[1]{0}', space=sflag, size = 0x4, scoped, tag = 'scoped memory for tpu_custom_call.1']
    #allocation6 [shape = 'u8[24576]{0}', space=vmem, size = 0x6000, scoped, tag = 'input window, operand 2, single buffered']
    #allocation7 [shape = 'u8[65536]{0}', space=vmem, size = 0x10000, scoped, tag = 'output window, operand 0, single buffered']
    %9 = vsyncpa [#allocation3], 0
    %10 = vsyncpa [#allocation5], 0
    // Predicated region
    $region2: #{tpu_custom_call.1} parent=1 // pred_check
      _
    $region3: #{tpu_custom_call.1} parent=1 // pred_check_branch
      %12 = sbr.rel (0) target = $region5
    $region4: #{tpu_custom_call.1} parent=1 // pred_region
      %s14 = ssub.s32 1024, 64
      %15 = vsyncadd [#allocation3], %s14
      %s16 = sshll.u32 [#allocation2], 4
      %s17 = int_to_ptr.vmem [resolvable:$true] %s16
      %22 = dma.hbm_to_vmem [thread:$0]  %s0, 64, %s17, [#allocation3], 64, 64, 4
    $region5: #{tpu_custom_call.1} parent=1 // pred_fallthru
      _
    // Predicated region
    $region6: #{tpu_custom_call.1} parent=1 // pred_check
      _
    $region7: #{tpu_custom_call.1} parent=1 // pred_check_branch
      %24 = sbr.rel (0) target = $region9
    $region8: #{tpu_custom_call.1} parent=1 // pred_region
      %s26 = ssub.s32 1024, 64
      %27 = vsyncadd [#allocation5], %s26
      %s28 = sshll.u32 [#allocation4], 4
      %s29 = int_to_ptr.vmem [resolvable:$true] %s28
      %34 = dma.hbm_to_vmem [thread:$0]  %s1, 64, %s29, [#allocation5], 64, 64, 4
    $region9: #{tpu_custom_call.1} parent=1 // pred_fallthru
      _
    // Predicated region
    $region10: #{tpu_custom_call.1} parent=1 // pred_check
      _
    $region11: #{tpu_custom_call.1} parent=1 // pred_check_branch
      %36 = sbr.rel (0) target = $region13
    $region12: #{tpu_custom_call.1} parent=1 // pred_region
      %s38 = ssub.s32 768, 768
      %39 = vsyncadd [#allocation5], %s38
      %s40 = sshll.u32 [#allocation6], 4
      %s41 = int_to_ptr.vmem [resolvable:$true] %s40
      %46 = dma.hbm_to_vmem [thread:$0]  %s2, 768, %s41, [#allocation5], 128, 128, 8
    $region13: #{tpu_custom_call.1} parent=1 // pred_fallthru
      _
    // Predicated region
    $region14: #{tpu_custom_call.1} parent=1 // pred_check
      _
    $region15: #{tpu_custom_call.1} parent=1 // pred_check_branch
      %48 = sbr.rel (0) target = $region17
    $region16: #{tpu_custom_call.1} parent=1 // pred_region
      _
    $region17: #{tpu_custom_call.1} parent=1 // pred_fallthru
      _
    // Predicated region
    $region18: #{tpu_custom_call.1} parent=1 // pred_check
      _
    $region19: #{tpu_custom_call.1} parent=1 // pred_check_branch
      %50 = sbr.rel (0) target = $region21
    $region20: #{tpu_custom_call.1} parent=1 // pred_region
      %51 = dma.done [#allocation3], 1024
    $region21: #{tpu_custom_call.1} parent=1 // pred_fallthru
      _
    // Predicated region
    $region22: #{tpu_custom_call.1} parent=1 // pred_check
      _
    $region23: #{tpu_custom_call.1} parent=1 // pred_check_branch
      %53 = sbr.rel (0) target = $region25
    $region24: #{tpu_custom_call.1} parent=1 // pred_region
      %54 = dma.done [#allocation5], 1024
    $region25: #{tpu_custom_call.1} parent=1 // pred_fallthru
      _
    // Predicated region
    $region26: #{tpu_custom_call.1} parent=1 // pred_check
      _
    $region27: #{tpu_custom_call.1} parent=1 // pred_check_branch
      %56 = sbr.rel (0) target = $region29
    $region28: #{tpu_custom_call.1} parent=1 // pred_region
      %57 = dma.done [#allocation5], 768
    $region29: #{tpu_custom_call.1} parent=1 // pred_fallthru
      _
    %v59 = vld [vmem:[#allocation2] sm:$0xf]
    %v60 = vld [vmem:[#allocation2 + $0x4] sm:$0xf]
    %v61 = vld [vmem:[#allocation2 + $0x8] sm:$0xf]
    %v62 = vld [vmem:[#allocation2 + $0xc] sm:$0xf]
    %v63 = vld [vmem:[#allocation2 + $0x10] sm:$0xf]
    %v64 = vld [vmem:[#allocation2 + $0x14] sm:$0xf]
    %v65 = vld [vmem:[#allocation2 + $0x18] sm:$0xf]
    %v66 = vld [vmem:[#allocation2 + $0x1c] sm:$0xf]
    %v67 = vld [vmem:[#allocation2 + $0x20] sm:$0xf]
    %v68 = vld [vmem:[#allocation2 + $0x24] sm:$0xf]
    %v69 = vld [vmem:[#allocation2 + $0x28] sm:$0xf]
    %v70 = vld [vmem:[#allocation2 + $0x2c] sm:$0xf]
    %v71 = vld [vmem:[#allocation2 + $0x30] sm:$0xf]
    %v72 = vld [vmem:[#allocation2 + $0x34] sm:$0xf]
    %v73 = vld [vmem:[#allocation2 + $0x38] sm:$0xf]
    %v74 = vld [vmem:[#allocation2 + $0x3c] sm:$0xf]
    %v75 = vld [vmem:[#allocation4] sm:$0xf]
    %v76 = vld [vmem:[#allocation4 + $0x4] sm:$0xf]
    %v77 = vld [vmem:[#allocation4 + $0x8] sm:$0xf]
    %v78 = vld [vmem:[#allocation4 + $0xc] sm:$0xf]
    %v79 = vld [vmem:[#allocation4 + $0x10] sm:$0xf]
    %v80 = vld [vmem:[#allocation4 + $0x14] sm:$0xf]
    %v81 = vld [vmem:[#allocation4 + $0x18] sm:$0xf]
    %v82 = vld [vmem:[#allocation4 + $0x1c] sm:$0xf]
    %v83 = vld [vmem:[#allocation4 + $0x20] sm:$0xf]
    %v84 = vld [vmem:[#allocation4 + $0x24] sm:$0xf]
    %v85 = vld [vmem:[#allocation4 + $0x28] sm:$0xf]
    %v86 = vld [vmem:[#allocation4 + $0x2c] sm:$0xf]
    %v87 = vld [vmem:[#allocation4 + $0x30] sm:$0xf]
    %v88 = vld [vmem:[#allocation4 + $0x34] sm:$0xf]
    %v89 = vld [vmem:[#allocation4 + $0x38] sm:$0xf]
    %v90 = vld [vmem:[#allocation4 + $0x3c] sm:$0xf]
    %v107 = vunpack.c.l.b16 %v59
    %v108 = vunpack.c.l.b16 %v60
    %v109 = vunpack.c.l.b16 %v61
    %v110 = vunpack.c.l.b16 %v62
    %v111 = vunpack.c.l.b16 %v63
    %v112 = vunpack.c.l.b16 %v64
    %v113 = vunpack.c.l.b16 %v65
    %v114 = vunpack.c.l.b16 %v66
    %v115 = vunpack.c.l.b16 %v67
    %v116 = vunpack.c.l.b16 %v68
    %v117 = vunpack.c.l.b16 %v69
    %v118 = vunpack.c.l.b16 %v70
    %v119 = vunpack.c.l.b16 %v71
    %v120 = vunpack.c.l.b16 %v72
    %v121 = vunpack.c.l.b16 %v73
    %v122 = vunpack.c.l.b16 %v74
    %v123 = vpack.c.b16 %v108, %v107
    %v124 = vpack.c.b16 %v110, %v109
    %v125 = vpack.c.b16 %v112, %v111
    %v126 = vpack.c.b16 %v114, %v113
    %v127 = vpack.c.b16 %v116, %v115
    %v128 = vpack.c.b16 %v118, %v117
    %v129 = vpack.c.b16 %v120, %v119
    %v130 = vpack.c.b16 %v122, %v121
    %v147 = vunpack.c.l.b16 %v75
    %v148 = vunpack.c.l.b16 %v76
    %v149 = vunpack.c.l.b16 %v77
    %v150 = vunpack.c.l.b16 %v78
    %v151 = vunpack.c.l.b16 %v79
    %v152 = vunpack.c.l.b16 %v80
    %v153 = vunpack.c.l.b16 %v81
    %v154 = vunpack.c.l.b16 %v82
    %v155 = vunpack.c.l.b16 %v83
    %v156 = vunpack.c.l.b16 %v84
    %v157 = vunpack.c.l.b16 %v85
    %v158 = vunpack.c.l.b16 %v86
    %v159 = vunpack.c.l.b16 %v87
    %v160 = vunpack.c.l.b16 %v88
    %v161 = vunpack.c.l.b16 %v89
    %v162 = vunpack.c.l.b16 %v90
    %v163 = vpack.c.b16 %v148, %v147
    %v164 = vpack.c.b16 %v150, %v149
    %v165 = vpack.c.b16 %v152, %v151
    %v166 = vpack.c.b16 %v154, %v153
    %v167 = vpack.c.b16 %v156, %v155
    %v168 = vpack.c.b16 %v158, %v157
    %v169 = vpack.c.b16 %v160, %v159
    %v170 = vpack.c.b16 %v162, %v161
    %171 = vrot.lane.b32.xlu0 %v163, 32
    %v172 = vpop.permute.xlu0 %171
    %173 = vrot.lane.b32.xlu0 %v164, 32
    %v174 = vpop.permute.xlu0 %173
    %175 = vrot.lane.b32.xlu0 %v165, 32
    %v176 = vpop.permute.xlu0 %175
    %177 = vrot.lane.b32.xlu0 %v166, 32
    %v178 = vpop.permute.xlu0 %177
    %179 = vrot.lane.b32.xlu0 %v167, 32
    %v180 = vpop.permute.xlu0 %179
    %181 = vrot.lane.b32.xlu0 %v168, 32
    %v182 = vpop.permute.xlu0 %181
    %183 = vrot.lane.b32.xlu0 %v169, 32
    %v184 = vpop.permute.xlu0 %183
    %185 = vrot.lane.b32.xlu0 %v170, 32
    %v186 = vpop.permute.xlu0 %185
    %vm187 = vcmask 261120
    %v190 = vsel %vm187, %v123, %v172
    %v193 = vsel %vm187, %v124, %v174
    %v196 = vsel %vm187, %v125, %v176
    %v199 = vsel %vm187, %v126, %v178
    %v202 = vsel %vm187, %v127, %v180
    %v205 = vsel %vm187, %v128, %v182
    %v208 = vsel %vm187, %v129, %v184
    %v211 = vsel %vm187, %v130, %v186
    %v212 = vld [vmem:[#allocation6] sm:$0xff]
    %v213 = vld [vmem:[#allocation6 + $0x8] sm:$0xff]
    %v214 = vld [vmem:[#allocation6 + $0x10] sm:$0xff]
    %v215 = vld [vmem:[#allocation6 + $0x18] sm:$0xff]
    %v216 = vld [vmem:[#allocation6 + $0x20] sm:$0xff]
    %v217 = vld [vmem:[#allocation6 + $0x28] sm:$0xff]
    %v218 = vld [vmem:[%s3] sm:$0x3]
    %v220 = vlaneseq
    %v221 = vshrl.u32 %v220, 7
    %v222 = vsub.s32 0, %v221
    %v223 = vrot.slane %v218, %v222
    %v224 = vlaneseq
    %v225 = vshrl.u32 %v224, 7
    %v226 = vsub.s32 1, %v225
    %v227 = vrot.slane %v218, %v226
    %v236 = vunpack.c.l.b16 %v212
    %v237 = vunpack.c.h.b16 %v212
    %v238 = vunpack.c.l.b16 %v213
    %v239 = vunpack.c.h.b16 %v213
    %v240 = vunpack.c.l.b16 %v214
    %v241 = vunpack.c.h.b16 %v214
    %v242 = vunpack.c.l.b16 %v215
    %v243 = vunpack.c.h.b16 %v215
    %v244 = vunpack.c.l.b16 %v216
    %v245 = vunpack.c.h.b16 %v216
    %v246 = vunpack.c.l.b16 %v217
    %v247 = vunpack.c.h.b16 %v217
    %v248 = vpack.c.b16 %v238, %v236
    %v249 = vpack.c.b16 %v239, %v237
    %v250 = vpack.c.b16 %v242, %v240
    %v251 = vpack.c.b16 %v243, %v241
    %v252 = vpack.c.b16 %v246, %v244
    %v253 = vpack.c.b16 %v247, %v245
    %vm260 = vcmask 392192
    %v261 = vsel %vm260, %v190, 0
    %v263 = vsel %vm260, %v193, 0
    %v265 = vsel %vm260, %v196, 0
    %v267 = vsel %vm260, %v199, 0
    %v269 = vsel %vm260, %v202, 0
    %v271 = vsel %vm260, %v205, 0
    %v273 = vsel %vm260, %v208, 0
    %v275 = vsel %vm260, %v211, 0
    %277 = vmatprep.subr.bf16.mxu0 %v249
    %278 = vmatpush1.bf16.msra.mxu0 %v248
    %279 = vmatprep.subr.bf16.mxu0 %v251
    %280 = vmatpush1.bf16.msra.mxu0 %v250
    %281 = vmatprep.subr.bf16.mxu0 %v253
    %282 = vmatpush1.bf16.msra.mxu0 %v252
    %283 = vmatprep.subr.bf16.mxu0 0
    %284 = vmatpush1.bf16.msra.mxu0 0
    %285 = vmatprep.subr.bf16.mxu0 0
    %286 = vmatpush1.bf16.msra.mxu0 0
    %287 = vmatprep.subr.bf16.mxu0 0
    %288 = vmatpush1.bf16.msra.mxu0 0
    %289 = vmatprep.subr.bf16.mxu0 0
    %290 = vmatpush1.bf16.msra.mxu0 0
    %291 = vmatprep.subr.bf16.mxu0 0
    %292 = vmatpush1.bf16.msra.mxu0 0
    %293 = vmatprep.subr.bf16.mxu0 0
    %294 = vmatpush1.bf16.msra.mxu0 0
    %295 = vmatprep.subr.bf16.mxu0 0
    %296 = vmatpush1.bf16.msra.mxu0 0
    %297 = vmatprep.subr.bf16.mxu0 0
    %298 = vmatpush1.bf16.msra.mxu0 0
    %299 = vmatprep.subr.bf16.mxu0 0
    %300 = vmatpush1.bf16.msra.mxu0 0
    %301 = vmatprep.subr.bf16.mxu0 0
    %302 = vmatpush1.bf16.msra.mxu0 0
    %303 = vmatprep.subr.bf16.mxu0 0
    %304 = vmatpush1.bf16.msra.mxu0 0
    %305 = vmatprep.subr.bf16.mxu0 0
    %306 = vmatpush1.bf16.msra.mxu0 0
    %307 = vmatprep.subr.bf16.mxu0 0
    %308 = vmatpush1.bf16.msra.mxu0 0
    %309 = vmatprep.mubr.bf16.mxu0 0
    %310 = vmatmul.mubr.bf16.gmra.mrb[0].mxu0 %v261
    %v311 = vpop.f32.mrb[0].mxu0
    %v312 = vadd.f32 %v223, %v311
    %v313 = vpop.f32.mrb[0].mxu0
    %v314 = vadd.f32 %v227, %v313
    %v315 = vpop.f32.mrb[0].mxu0
    %v316 = vadd.f32 %v223, %v315
    %v317 = vpop.f32.mrb[0].mxu0
    %v318 = vadd.f32 %v227, %v317
    %319 = vmatprep.mubr.bf16.mxu0 0
    %320 = vmatmul.mubr.bf16.gmra.mrb[0].mxu0 %v263
    %v321 = vpop.f32.mrb[0].mxu0
    %v322 = vadd.f32 %v223, %v321
    %v323 = vpop.f32.mrb[0].mxu0
    %v324 = vadd.f32 %v227, %v323
    %v325 = vpop.f32.mrb[0].mxu0
    %v326 = vadd.f32 %v223, %v325
    %v327 = vpop.f32.mrb[0].mxu0
    %v328 = vadd.f32 %v227, %v327
    %329 = vmatprep.mubr.bf16.mxu0 0
    %330 = vmatmul.mubr.bf16.gmra.mrb[0].mxu0 %v265
    %v331 = vpop.f32.mrb[0].mxu0
    %v332 = vadd.f32 %v223, %v331
    %v333 = vpop.f32.mrb[0].mxu0
    %v334 = vadd.f32 %v227, %v333
    %v335 = vpop.f32.mrb[0].mxu0
    %v336 = vadd.f32 %v223, %v335
    %v337 = vpop.f32.mrb[0].mxu0
    %v338 = vadd.f32 %v227, %v337
    %339 = vmatprep.mubr.bf16.mxu0 0
    %340 = vmatmul.mubr.bf16.gmra.mrb[0].mxu0 %v267
    %v341 = vpop.f32.mrb[0].mxu0
    %v342 = vadd.f32 %v223, %v341
    %v343 = vpop.f32.mrb[0].mxu0
    %v344 = vadd.f32 %v227, %v343
    %v345 = vpop.f32.mrb[0].mxu0
    %v346 = vadd.f32 %v223, %v345
    %v347 = vpop.f32.mrb[0].mxu0
    %v348 = vadd.f32 %v227, %v347
    %349 = vmatprep.mubr.bf16.mxu0 0
    %350 = vmatmul.mubr.bf16.gmra.mrb[0].mxu0 %v269
    %v351 = vpop.f32.mrb[0].mxu0
    %v352 = vadd.f32 %v223, %v351
    %v353 = vpop.f32.mrb[0].mxu0
    %v354 = vadd.f32 %v227, %v353
    %v355 = vpop.f32.mrb[0].mxu0
    %v356 = vadd.f32 %v223, %v355
    %v357 = vpop.f32.mrb[0].mxu0
    %v358 = vadd.f32 %v227, %v357
    %359 = vmatprep.mubr.bf16.mxu0 0
    %360 = vmatmul.mubr.bf16.gmra.mrb[0].mxu0 %v271
    %v361 = vpop.f32.mrb[0].mxu0
    %v362 = vadd.f32 %v223, %v361
    %v363 = vpop.f32.mrb[0].mxu0
    %v364 = vadd.f32 %v227, %v363
    %v365 = vpop.f32.mrb[0].mxu0
    %v366 = vadd.f32 %v223, %v365
    %v367 = vpop.f32.mrb[0].mxu0
    %v368 = vadd.f32 %v227, %v367
    %369 = vmatprep.mubr.bf16.mxu0 0
    %370 = vmatmul.mubr.bf16.gmra.mrb[0].mxu0 %v273
    %v371 = vpop.f32.mrb[0].mxu0
    %v372 = vadd.f32 %v223, %v371
    %v373 = vpop.f32.mrb[0].mxu0
    %v374 = vadd.f32 %v227, %v373
    %v375 = vpop.f32.mrb[0].mxu0
    %v376 = vadd.f32 %v223, %v375
    %v377 = vpop.f32.mrb[0].mxu0
    %v378 = vadd.f32 %v227, %v377
    %379 = vmatprep.mubr.bf16.mxu0 0
    %380 = vmatmul.mubr.bf16.gmra.mrb[0].mxu0 %v275
    %v381 = vpop.f32.mrb[0].mxu0
    %v382 = vadd.f32 %v223, %v381
    %v383 = vpop.f32.mrb[0].mxu0
    %v384 = vadd.f32 %v227, %v383
    %v385 = vpop.f32.mrb[0].mxu0
    %v386 = vadd.f32 %v223, %v385
    %v387 = vpop.f32.mrb[0].mxu0
    %v388 = vadd.f32 %v227, %v387
    %389 = vdwg.mxu0
    %v390 = vmax.f32 %v312, 0.0
    %v391 = vmax.f32 %v314, 0.0
    %v392 = vmax.f32 %v316, 0.0
    %v393 = vmax.f32 %v318, 0.0
    %v394 = vmax.f32 %v322, 0.0
    %v395 = vmax.f32 %v324, 0.0
    %v396 = vmax.f32 %v326, 0.0
    %v397 = vmax.f32 %v328, 0.0
    %v398 = vmax.f32 %v332, 0.0
    %v399 = vmax.f32 %v334, 0.0
    %v400 = vmax.f32 %v336, 0.0
    %v401 = vmax.f32 %v338, 0.0
    %v402 = vmax.f32 %v342, 0.0
    %v403 = vmax.f32 %v344, 0.0
    %v404 = vmax.f32 %v346, 0.0
    %v405 = vmax.f32 %v348, 0.0
    %v406 = vmax.f32 %v352, 0.0
    %v407 = vmax.f32 %v354, 0.0
    %v408 = vmax.f32 %v356, 0.0
    %v409 = vmax.f32 %v358, 0.0
    %v410 = vmax.f32 %v362, 0.0
    %v411 = vmax.f32 %v364, 0.0
    %v412 = vmax.f32 %v366, 0.0
    %v413 = vmax.f32 %v368, 0.0
    %v414 = vmax.f32 %v372, 0.0
    %v415 = vmax.f32 %v374, 0.0
    %v416 = vmax.f32 %v376, 0.0
    %v417 = vmax.f32 %v378, 0.0
    %v418 = vmax.f32 %v382, 0.0
    %v419 = vmax.f32 %v384, 0.0
    %v420 = vmax.f32 %v386, 0.0
    %v421 = vmax.f32 %v388, 0.0
    %v422 = vmul.f32 %v390, %v391
    %v423 = vmul.f32 %v392, %v393
    %v424 = vmul.f32 %v394, %v395
    %v425 = vmul.f32 %v396, %v397
    %v426 = vmul.f32 %v398, %v399
    %v427 = vmul.f32 %v400, %v401
    %v428 = vmul.f32 %v402, %v403
    %v429 = vmul.f32 %v404, %v405
    %v430 = vmul.f32 %v406, %v407
    %v431 = vmul.f32 %v408, %v409
    %v432 = vmul.f32 %v410, %v411
    %v433 = vmul.f32 %v412, %v413
    %v434 = vmul.f32 %v414, %v415
    %v435 = vmul.f32 %v416, %v417
    %v436 = vmul.f32 %v418, %v419
    %v437 = vmul.f32 %v420, %v421
    %438 = vadd.xlane.f32.xlu0 %v422
    %v439 = vpop.xlane.xlu0 %438
    %440 = vadd.xlane.f32.xlu0 %v423
    %v441 = vpop.xlane.xlu0 %440
    %442 = vadd.xlane.f32.xlu0 %v424
    %v443 = vpop.xlane.xlu0 %442
    %444 = vadd.xlane.f32.xlu0 %v425
    %v445 = vpop.xlane.xlu0 %444
    %446 = vadd.xlane.f32.xlu0 %v426
    %v447 = vpop.xlane.xlu0 %446
    %448 = vadd.xlane.f32.xlu0 %v427
    %v449 = vpop.xlane.xlu0 %448
    %450 = vadd.xlane.f32.xlu0 %v428
    %v451 = vpop.xlane.xlu0 %450
    %452 = vadd.xlane.f32.xlu0 %v429
    %v453 = vpop.xlane.xlu0 %452
    %454 = vadd.xlane.f32.xlu0 %v430
    %v455 = vpop.xlane.xlu0 %454
    %456 = vadd.xlane.f32.xlu0 %v431
    %v457 = vpop.xlane.xlu0 %456
    %458 = vadd.xlane.f32.xlu0 %v432
    %v459 = vpop.xlane.xlu0 %458
    %460 = vadd.xlane.f32.xlu0 %v433
    %v461 = vpop.xlane.xlu0 %460
    %462 = vadd.xlane.f32.xlu0 %v434
    %v463 = vpop.xlane.xlu0 %462
    %464 = vadd.xlane.f32.xlu0 %v435
    %v465 = vpop.xlane.xlu0 %464
    %466 = vadd.xlane.f32.xlu0 %v436
    %v467 = vpop.xlane.xlu0 %466
    %468 = vadd.xlane.f32.xlu0 %v437
    %v469 = vpop.xlane.xlu0 %468
    %vm470 = vcmask 7168
    %471 = vst.msk [vmem:[#allocation7] sm:$0xff] %vm470, %v439
    %472 = vst.msk [vmem:[#allocation7 + $0x8] sm:$0xff] %vm470, %v441
    %473 = vst.msk [vmem:[#allocation7 + $0x10] sm:$0xff] %vm470, %v443
    %474 = vst.msk [vmem:[#allocation7 + $0x18] sm:$0xff] %vm470, %v445
    %475 = vst.msk [vmem:[#allocation7 + $0x20] sm:$0xff] %vm470, %v447
    %476 = vst.msk [vmem:[#allocation7 + $0x28] sm:$0xff] %vm470, %v449
    %477 = vst.msk [vmem:[#allocation7 + $0x30] sm:$0xff] %vm470, %v451
    %478 = vst.msk [vmem:[#allocation7 + $0x38] sm:$0xff] %vm470, %v453
    %479 = vst.msk [vmem:[#allocation7 + $0x40] sm:$0xff] %vm470, %v455
    %480 = vst.msk [vmem:[#allocation7 + $0x48] sm:$0xff] %vm470, %v457
    %481 = vst.msk [vmem:[#allocation7 + $0x50] sm:$0xff] %vm470, %v459
    %482 = vst.msk [vmem:[#allocation7 + $0x58] sm:$0xff] %vm470, %v461
    %483 = vst.msk [vmem:[#allocation7 + $0x60] sm:$0xff] %vm470, %v463
    %484 = vst.msk [vmem:[#allocation7 + $0x68] sm:$0xff] %vm470, %v465
    %485 = vst.msk [vmem:[#allocation7 + $0x70] sm:$0xff] %vm470, %v467
    %486 = vst.msk [vmem:[#allocation7 + $0x78] sm:$0xff] %vm470, %v469
    // Predicated region
    $region30: #{tpu_custom_call.1} parent=1 // pred_check
      _
    $region31: #{tpu_custom_call.1} parent=1 // pred_check_branch
      %488 = sbr.rel (0) target = $region33
    $region32: #{tpu_custom_call.1} parent=1 // pred_region
      // Predicated region
      $region34: #{tpu_custom_call.1} parent=32 // pred_check
        _
      $region35: #{tpu_custom_call.1} parent=32 // pred_check_branch
        %490 = sbr.rel (0) target = $region37
      $region36: #{tpu_custom_call.1} parent=32 // pred_region
        // Predicated region
        $region38: #{tpu_custom_call.1} parent=36 // pred_check
          _
        $region39: #{tpu_custom_call.1} parent=36 // pred_check_branch
          %492 = sbr.rel (0) target = $region41
        $region40: #{tpu_custom_call.1} parent=36 // pred_region
          // Predicated region
          $region53: #{tpu_custom_call.1} parent=40 // pred_check
            _
          $region54: #{tpu_custom_call.1} parent=40 // pred_check_branch
            %507 = sbr.rel (0) target = $region56
          $region55: #{tpu_custom_call.1} parent=40 // pred_region
            loop: start=0, step=1, limit=1
            $region57: #{tpu_custom_call.1} parent=55 // loop_pre_header
              _
            $region58: #{tpu_custom_call.1} parent=55 // loop_header
              %s509 = sphi 0, %s513
              %p510 = scmp.ge.s32.totalorder %s509, 1
              %s514 = sphi [#allocation7], [#allocation7]
              %s515 = sphi %s4, %s4
            $region59: #{tpu_custom_call.1} parent=55 // loop_header_branch
              %512 = sbr.rel (%p510) target = $region63
            $region60: #{tpu_custom_call.1} parent=55 // loop_body
              %v516 = vld [vmem:[%s514] sm:$0xff]
              %517 = vst [vmem:[%s515] sm:$0xff] %v516
            $region61: #{tpu_custom_call.1} parent=55 // loop_footer
              %s513 = sadd.s32 1, %s509
            $region62: #{tpu_custom_call.1} parent=55 // loop_footer_branch
              %508 = sbr.rel target = $region58
            $region63: #{tpu_custom_call.1} parent=55 // loop_exit
              _
          $region56: #{tpu_custom_call.1} parent=40 // pred_fallthru
            _
          // Predicated region
          $region64: #{tpu_custom_call.1} parent=40 // pred_check
            _
          $region65: #{tpu_custom_call.1} parent=40 // pred_check_branch
            %519 = sbr.rel target = $region67
          $region66: #{tpu_custom_call.1} parent=40 // pred_region
            _
          $region67: #{tpu_custom_call.1} parent=40 // pred_fallthru
            _
        $region41: #{tpu_custom_call.1} parent=36 // pred_fallthru
          _
        // Predicated region
        $region42: #{tpu_custom_call.1} parent=36 // pred_check
          _
        $region43: #{tpu_custom_call.1} parent=36 // pred_check_branch
          %494 = sbr.rel target = $region45
        $region44: #{tpu_custom_call.1} parent=36 // pred_region
          loop: start=0, step=1, limit=1
          $region46: #{tpu_custom_call.1} parent=44 // loop_pre_header
            _
          $region47: #{tpu_custom_call.1} parent=44 // loop_header
            %s497 = sphi 0, %s501
            %p498 = scmp.ge.s32.totalorder %s497, 1
            %s502 = sphi [#allocation7], [#allocation7]
            %s503 = sphi %s4, %s4
          $region48: #{tpu_custom_call.1} parent=44 // loop_header_branch
            %500 = sbr.rel (%p498) target = $region52
          $region49: #{tpu_custom_call.1} parent=44 // loop_body
            %v504 = vld [vmem:[%s502] sm:$0xff]
            %505 = vst [vmem:[%s503] sm:$0xff] %v504
          $region50: #{tpu_custom_call.1} parent=44 // loop_footer
            %s501 = sadd.s32 1, %s497
          $region51: #{tpu_custom_call.1} parent=44 // loop_footer_branch
            %496 = sbr.rel target = $region47
          $region52: #{tpu_custom_call.1} parent=44 // loop_exit
            _
        $region45: #{tpu_custom_call.1} parent=36 // pred_fallthru
          _
      $region37: #{tpu_custom_call.1} parent=32 // pred_fallthru
        _
      %520 = vnop
    $region33: #{tpu_custom_call.1} parent=1 // pred_fallthru
      _
    // Predicated region
    $region68: #{tpu_custom_call.1} parent=1 // pred_check
      _
    $region69: #{tpu_custom_call.1} parent=1 // pred_check_branch
      %522 = sbr.rel (0) target = $region71
    $region70: #{tpu_custom_call.1} parent=1 // pred_region
      _
    $region71: #{tpu_custom_call.1} parent=1 // pred_fallthru
      _
    %523 = vsyncpa [#allocation3], 1
    %524 = vsyncpa [#allocation5], 1

</llo_original>
